<compile_context>
chip_gen: v6e
topology: v6e:2x2x1
jax: 0.10.0
libtpu: 0.0.40
codegen_flags: <defaults>
</compile_context>

<pallas_src>
import jax
import jax.numpy as jnp
from jax.experimental import pallas as pl
from jax.experimental.pallas import tpu as pltpu


# ---------------------------------------------------------------------------
# Kernel: one batch tile per grid step, all weights resident in VMEM.
# ---------------------------------------------------------------------------
def dqn_kernel(x_ref, w1_ref, b1_ref, w2_ref, b2_ref, wh_ref, bh_ref, o_ref):
    x = x_ref[...]

    # Layer 1: Linear + ReLU
    h1 = jnp.dot(x, w1_ref[...], preferred_element_type=jnp.float32) + b1_ref[...]
    h1 = jnp.maximum(h1, 0.0)

    # Layer 2: Linear + ReLU
    h2 = jnp.dot(h1, w2_ref[...], preferred_element_type=jnp.float32) + b2_ref[...]
    h2 = jnp.maximum(h2, 0.0)

    # Fused value+advantage head: single matmul, columns = [v | a_0 ... a_{out-1}]
    head = jnp.dot(h2, wh_ref[...], preferred_element_type=jnp.float32) + bh_ref[...]
    v = head[:, :1]          # [TB, 1]
    a = head[:, 1:]          # [TB, out]

    # Dueling combination: Q = V + A - mean(A, axis=1, keepdims=True)
    o_ref[...] = (v + a - jnp.mean(a, axis=-1, keepdims=True)).astype(o_ref.dtype)


# ---------------------------------------------------------------------------
# One-time param preparation (done at init / after each optimizer update,
# NOT per forward call): transpose torch [out, in] weights to [in, out],
# fuse the V and A heads, and reshape biases into broadcastable rows.
# ---------------------------------------------------------------------------
def prepare_params(params):
    return {
        "w1": jnp.asarray(params["w1"]).T,                       # [in, hidden]
        "b1": jnp.asarray(params["b1"])[None, :],                # [1, hidden]
        "w2": jnp.asarray(params["w2"]).T,                       # [hidden, hidden]
        "b2": jnp.asarray(params["b2"])[None, :],                # [1, hidden]
        "w_head": jnp.concatenate(                               # [hidden, 1 + out]
            [jnp.asarray(params["v_w"]).T, jnp.asarray(params["a_w"]).T], axis=1),
        "b_head": jnp.concatenate(                               # [1, 1 + out]
            [jnp.asarray(params["v_b"]), jnp.asarray(params["a_b"])])[None, :],
    }


# ---------------------------------------------------------------------------
# Forward wrapper: grid over the batch dimension, weights resident in VMEM.
# ---------------------------------------------------------------------------
def dqn_forward(x, kparams, *, block_b=None):
    """x: [B, input_size] float32. kparams: output of prepare_params()."""
    B, in_size = x.shape
    hidden = kparams["w1"].shape[1]
    head_cols = kparams["w_head"].shape[1]
    out_size = head_cols - 1

    # Batch tile: multiple of 8 (sublane), capped at 256 rows; weights + 2x double-buffered
    # (x tile + out tile) stay far under even v7x's 64 MiB VMEM for realistic DQN sizes.
    if block_b is None:
        block_b = min(256, ((max(B, 1) + 7) // 8) * 8)

    # Pad batch to a multiple of the tile (padding rows are computed then dropped).
    num_blocks = pl.cdiv(B, block_b)
    Bp = num_blocks * block_b
    if Bp != B:
        x = jnp.pad(x, ((0, Bp - B), (0, 0)))

    # Weights/biases: constant index_map -> fetched once, VMEM-resident across grid steps.
    const = lambda i: (0, 0)

    out = pl.pallas_call(
        dqn_kernel,
        out_shape=jax.ShapeDtypeStruct((Bp, out_size), jnp.float32),
        grid=(num_blocks,),
        in_specs=[
            pl.BlockSpec((block_b, in_size), lambda i: (i, 0)),     # x: tiled over batch
            pl.BlockSpec((in_size, hidden), const),                 # w1
            pl.BlockSpec((1, hidden), const),                       # b1
            pl.BlockSpec((hidden, hidden), const),                  # w2
            pl.BlockSpec((1, hidden), const),                       # b2
            pl.BlockSpec((hidden, head_cols), const),               # fused [wv | wa]
            pl.BlockSpec((1, head_cols), const),                    # fused [bv | ba]
        ],
        out_specs=pl.BlockSpec((block_b, out_size), lambda i: (i, 0)),
        compiler_params=pltpu.CompilerParams(
            dimension_semantics=("parallel",),                      # batch shards across TCs
        ),
    )(x, kparams["w1"], kparams["b1"], kparams["w2"], kparams["b2"],
      kparams["w_head"], kparams["b_head"])

    return out[:B] if Bp != B else out


# ---------------------------------------------------------------------------
# Deterministic init mimicking nn.Linear's U(-1/sqrt(fan_in), 1/sqrt(fan_in)),
# stored in PyTorch layout ([out, in] weights, [out] biases).
# ---------------------------------------------------------------------------
def init_params(key, input_size, output_size, hidden_layer_size):
    def linear(k, fan_in, fan_out):
        kw, kb = jax.random.split(k)
        bound = 1.0 / jnp.sqrt(fan_in)
        w = jax.random.uniform(kw, (fan_out, fan_in), jnp.float32, -bound, bound)
        b = jax.random.uniform(kb, (fan_out,), jnp.float32, -bound, bound)
        return w, b

    k1, k2, k3, k4 = jax.random.split(key, 4)
    w1, b1 = linear(k1, input_size, hidden_layer_size)
    w2, b2 = linear(k2, hidden_layer_size, hidden_layer_size)
    vw, vb = linear(k3, hidden_layer_size, 1)
    aw, ab = linear(k4, hidden_layer_size, output_size)
    return {"w1": w1, "b1": b1, "w2": w2, "b2": b2,
            "v_w": vw, "v_b": vb, "a_w": aw, "a_b": ab}


def reference_forward(x, p):
    h1 = jnp.maximum(x @ p["w1"].T + p["b1"], 0.0)
    h2 = jnp.maximum(h1 @ p["w2"].T + p["b2"], 0.0)
    v = h2 @ p["v_w"].T + p["v_b"]
    a = h2 @ p["a_w"].T + p["a_b"]
    return v + a - jnp.mean(a, axis=1, keepdims=True)


if __name__ == "__main__":
    input_size, output_size, hidden = 8, 4, 32
    batch = 8

    key = jax.random.PRNGKey(0)
    kx, kp = jax.random.split(key)
    x = jax.random.normal(kx, (batch, input_size), jnp.float32)
    params = init_params(kp, input_size, output_size, hidden)

    # One-time (per weight update) param prep -> forward path is a single pallas_call.
    kparams = prepare_params(params)

    out = dqn_forward(x, kparams)
    out = jax.block_until_ready(out)

    ref = reference_forward(x, params)
    assert out.shape == (batch, output_size)
    assert jnp.allclose(out, ref, atol=1e-5, rtol=1e-5)

    # Also exercise a non-tile-aligned larger batch (padding path + multi-step grid).
    x_big = jax.random.normal(kx, (300, input_size), jnp.float32)
    out_big = jax.block_until_ready(dqn_forward(x_big, kparams, block_b=128))
    ref_big = reference_forward(x_big, params)
    assert out_big.shape == (300, output_size)
    assert jnp.allclose(out_big, ref_big, atol=1e-5, rtol=1e-5)

    print("KERNEL_OK")
</pallas_src>

<mosaic_0001>
module attributes {stable_mosaic.version = 11 : i64} {
  func.func @dqn_kernel(%arg0: i32, %arg1: memref<8x8xf32, #tpu.memory_space<vmem>>, %arg2: memref<8x32xf32, #tpu.memory_space<vmem>>, %arg3: memref<1x32xf32, #tpu.memory_space<vmem>>, %arg4: memref<32x32xf32, #tpu.memory_space<vmem>>, %arg5: memref<1x32xf32, #tpu.memory_space<vmem>>, %arg6: memref<32x5xf32, #tpu.memory_space<vmem>>, %arg7: memref<1x5xf32, #tpu.memory_space<vmem>>, %arg8: memref<8x4xf32, #tpu.memory_space<vmem>>) attributes {dimension_semantics = [#tpu.dimension_semantics<parallel>], iteration_bounds = array<i64: 1>, scalar_prefetch = 0 : i64, scratch_operands = 0 : i64, tpu.core_type = #tpu.core_type<tc>, window_params = [{transform_indices = @transform_0, window_bounds = array<i64: 8, 8>}, {pipeline_mode = #tpu.pipeline_mode<synchronous>, transform_indices = @transform_1, window_bounds = array<i64: 8, 32>}, {pipeline_mode = #tpu.pipeline_mode<synchronous>, transform_indices = @transform_2, window_bounds = array<i64: 1, 32>}, {pipeline_mode = #tpu.pipeline_mode<synchronous>, transform_indices = @transform_3, window_bounds = array<i64: 32, 32>}, {pipeline_mode = #tpu.pipeline_mode<synchronous>, transform_indices = @transform_4, window_bounds = array<i64: 1, 32>}, {pipeline_mode = #tpu.pipeline_mode<synchronous>, transform_indices = @transform_5, window_bounds = array<i64: 32, 5>}, {pipeline_mode = #tpu.pipeline_mode<synchronous>, transform_indices = @transform_6, window_bounds = array<i64: 1, 5>}, {transform_indices = @transform_7, window_bounds = array<i64: 8, 4>}]} {
    %c0 = arith.constant 0 : index
    %c0_0 = arith.constant 0 : index
    %0 = vector.load %arg1[%c0, %c0_0] : memref<8x8xf32, #tpu.memory_space<vmem>>, vector<8x8xf32>
    %c0_1 = arith.constant 0 : index
    %c0_2 = arith.constant 0 : index
    %1 = vector.load %arg2[%c0_1, %c0_2] : memref<8x32xf32, #tpu.memory_space<vmem>>, vector<8x32xf32>
    %cst = arith.constant dense<0.000000e+00> : vector<8x32xf32>
    %2 = tpu.matmul %0, %1, %cst {dimension_numbers = #tpu.dot_dimension_numbers<[1], [0], [0], [1], [0, 0, 1, 1], [], []>} : vector<8x8xf32>, vector<8x32xf32>, vector<8x32xf32> -> vector<8x32xf32>
    %c0_3 = arith.constant 0 : index
    %c0_4 = arith.constant 0 : index
    %3 = vector.load %arg3[%c0_3, %c0_4] : memref<1x32xf32, #tpu.memory_space<vmem>>, vector<1x32xf32>
    %4 = vector.broadcast %3 : vector<1x32xf32> to vector<8x32xf32>
    %5 = arith.addf %2, %4 : vector<8x32xf32>
    %cst_5 = arith.constant 0.000000e+00 : f32
    %6 = vector.broadcast %cst_5 : f32 to vector<8x32xf32>
    %7 = arith.maximumf %5, %6 : vector<8x32xf32>
    %c0_6 = arith.constant 0 : index
    %c0_7 = arith.constant 0 : index
    %8 = vector.load %arg4[%c0_6, %c0_7] : memref<32x32xf32, #tpu.memory_space<vmem>>, vector<32x32xf32>
    %cst_8 = arith.constant dense<0.000000e+00> : vector<8x32xf32>
    %9 = tpu.matmul %7, %8, %cst_8 {dimension_numbers = #tpu.dot_dimension_numbers<[1], [0], [0], [1], [0, 0, 1, 1], [], []>} : vector<8x32xf32>, vector<32x32xf32>, vector<8x32xf32> -> vector<8x32xf32>
    %c0_9 = arith.constant 0 : index
    %c0_10 = arith.constant 0 : index
    %10 = vector.load %arg5[%c0_9, %c0_10] : memref<1x32xf32, #tpu.memory_space<vmem>>, vector<1x32xf32>
    %11 = vector.broadcast %10 : vector<1x32xf32> to vector<8x32xf32>
    %12 = arith.addf %9, %11 : vector<8x32xf32>
    %cst_11 = arith.constant 0.000000e+00 : f32
    %13 = vector.broadcast %cst_11 : f32 to vector<8x32xf32>
    %14 = arith.maximumf %12, %13 : vector<8x32xf32>
    %c0_12 = arith.constant 0 : index
    %c0_13 = arith.constant 0 : index
    %15 = vector.load %arg6[%c0_12, %c0_13] : memref<32x5xf32, #tpu.memory_space<vmem>>, vector<32x5xf32>
    %cst_14 = arith.constant dense<0.000000e+00> : vector<8x5xf32>
    %16 = tpu.matmul %14, %15, %cst_14 {dimension_numbers = #tpu.dot_dimension_numbers<[1], [0], [0], [1], [0, 0, 1, 1], [], []>} : vector<8x32xf32>, vector<32x5xf32>, vector<8x5xf32> -> vector<8x5xf32>
    %c0_15 = arith.constant 0 : index
    %c0_16 = arith.constant 0 : index
    %17 = vector.load %arg7[%c0_15, %c0_16] : memref<1x5xf32, #tpu.memory_space<vmem>>, vector<1x5xf32>
    %18 = vector.broadcast %17 : vector<1x5xf32> to vector<8x5xf32>
    %19 = arith.addf %16, %18 : vector<8x5xf32>
    %20 = vector.extract_strided_slice %19 {offsets = [0, 0], sizes = [8, 1], strides = [1, 1]} : vector<8x5xf32> to vector<8x1xf32>
    %21 = vector.extract_strided_slice %19 {offsets = [0, 1], sizes = [8, 4], strides = [1, 1]} : vector<8x5xf32> to vector<8x4xf32>
    %22 = vector.broadcast %20 : vector<8x1xf32> to vector<8x4xf32>
    %23 = arith.addf %22, %21 : vector<8x4xf32>
    %cst_17 = arith.constant dense<0.000000e+00> : vector<8xf32>
    %24 = vector.multi_reduction <add>, %21, %cst_17 [1] : vector<8x4xf32> to vector<8xf32>
    %25 = vector.shape_cast %24 : vector<8xf32> to vector<8x1xf32>
    %cst_18 = arith.constant 4.000000e+00 : f32
    %26 = vector.broadcast %cst_18 : f32 to vector<8x1xf32>
    %27 = arith.divf %25, %26 : vector<8x1xf32>
    %28 = vector.broadcast %27 : vector<8x1xf32> to vector<8x4xf32>
    %29 = arith.subf %23, %28 : vector<8x4xf32>
    %c0_19 = arith.constant 0 : index
    %c0_20 = arith.constant 0 : index
    %30 = vector.load %arg8[%c0_19, %c0_20] : memref<8x4xf32, #tpu.memory_space<vmem>>, vector<8x4xf32>
    tpu.vector_store %arg8[%c0_19, %c0_20], %29 {strides = array<i32>} : memref<8x4xf32, #tpu.memory_space<vmem>>, vector<8x4xf32>,
    return
  }
  func.func @transform_0(%arg0: i32) -> (i32, i32) {
    %c0_i32 = arith.constant 0 : i32
    %c0_i32_0 = arith.constant 0 : i32
    return %arg0, %c0_i32 : i32, i32
  }
  func.func @transform_1(%arg0: i32) -> (i32, i32) {
    %c0_i32 = arith.constant 0 : i32
    %c0_i32_0 = arith.constant 0 : i32
    %c0_i32_1 = arith.constant 0 : i32
    return %c0_i32, %c0_i32_0 : i32, i32
  }
  func.func @transform_2(%arg0: i32) -> (i32, i32) {
    %c0_i32 = arith.constant 0 : i32
    %c0_i32_0 = arith.constant 0 : i32
    %c0_i32_1 = arith.constant 0 : i32
    return %c0_i32, %c0_i32_0 : i32, i32
  }
  func.func @transform_3(%arg0: i32) -> (i32, i32) {
    %c0_i32 = arith.constant 0 : i32
    %c0_i32_0 = arith.constant 0 : i32
    %c0_i32_1 = arith.constant 0 : i32
    return %c0_i32, %c0_i32_0 : i32, i32
  }
  func.func @transform_4(%arg0: i32) -> (i32, i32) {
    %c0_i32 = arith.constant 0 : i32
    %c0_i32_0 = arith.constant 0 : i32
    %c0_i32_1 = arith.constant 0 : i32
    return %c0_i32, %c0_i32_0 : i32, i32
  }
  func.func @transform_5(%arg0: i32) -> (i32, i32) {
    %c0_i32 = arith.constant 0 : i32
    %c0_i32_0 = arith.constant 0 : i32
    %c0_i32_1 = arith.constant 0 : i32
    return %c0_i32, %c0_i32_0 : i32, i32
  }
  func.func @transform_6(%arg0: i32) -> (i32, i32) {
    %c0_i32 = arith.constant 0 : i32
    %c0_i32_0 = arith.constant 0 : i32
    %c0_i32_1 = arith.constant 0 : i32
    return %c0_i32, %c0_i32_0 : i32, i32
  }
  func.func @transform_7(%arg0: i32) -> (i32, i32) {
    %c0_i32 = arith.constant 0 : i32
    %c0_i32_0 = arith.constant 0 : i32
    return %arg0, %c0_i32 : i32, i32
  }
}

</mosaic_0001>

<llo_original>
// kernel: tpu_custom_call.1
$region0: #{tpu_custom_call.1}
  #allocation0 [shape = 'u32[]', space=smem, size = 0x4, offset = 0x4, fixed_abs, tag = 'smem constant byte address 0x4 - core index']
  #allocation1 [shape = 'u32[144,128]{1,0:T(1,128)}', space=vmem, size = 0x12000, scoped, tag = 'internal scratch']
  %s0 = inlined_call_operand.vmem [shape: f32[8,8], index: 0, kind: input, shape index: {}]
  %s1 = inlined_call_operand.hbm [shape: f32[8,32], index: 1, kind: input, shape index: {}]
  %s2 = inlined_call_operand.vmem [shape: f32[1,32], index: 2, kind: input, shape index: {}]
  %s3 = inlined_call_operand.vmem [shape: f32[32,32], index: 3, kind: input, shape index: {}]
  %s4 = inlined_call_operand.hbm [shape: f32[1,32], index: 4, kind: input, shape index: {}]
  %s5 = inlined_call_operand.vmem [shape: f32[32,5], index: 5, kind: input, shape index: {}]
  %s6 = inlined_call_operand.vmem [shape: f32[1,5], index: 6, kind: input, shape index: {}]
  %s7 = inlined_call_operand.vmem [shape: f32[8,4], index: 7, kind: output, shape index: {}]
  %s8 = sld [smem:[#allocation0]]
  $region46: #{tpu_custom_call.1} parent=0
    _
  %s10 = ssub.s32 1, %s8
  %s11 = scalar_select 0, %s10, %s8
  $region1: #{tpu_custom_call.1} parent=0
    #allocation2 [shape = 'u8[4096]{0}', space=vmem, size = 0x1000, scoped, tag = 'input window, operand 1, single buffered']
    #allocation3 [shape = 's32[1]{0}', space=sflag, size = 0x4, scoped, tag = 'scoped memory for tpu_custom_call.1']
    #allocation4 [shape = 'u8[512]{0}', space=vmem, size = 0x400, scoped, tag = 'input window, operand 4, single buffered']
    #allocation5 [shape = 's32[1]{0}', space=sflag, size = 0x4, scoped, tag = 'scoped memory for tpu_custom_call.1']
    %12 = vsyncpa [#allocation3], 0
    %13 = vsyncpa [#allocation5], 0
    // Predicated region
    $region2: #{tpu_custom_call.1} parent=1 // pred_check
      _
    $region3: #{tpu_custom_call.1} parent=1 // pred_check_branch
      %15 = sbr.rel (0) target = $region5
    $region4: #{tpu_custom_call.1} parent=1 // pred_region
      _
    $region5: #{tpu_custom_call.1} parent=1 // pred_fallthru
      _
    // Predicated region
    $region6: #{tpu_custom_call.1} parent=1 // pred_check
      _
    $region7: #{tpu_custom_call.1} parent=1 // pred_check_branch
      %17 = sbr.rel (0) target = $region9
    $region8: #{tpu_custom_call.1} parent=1 // pred_region
      %s19 = ssub.s32 128, 128
      %20 = vsyncadd [#allocation3], %s19
      %s22 = sshll.u32 [#allocation2], 4
      %s23 = int_to_ptr.vmem [resolvable:$true] %s22
      %25 = dma.hbm_to_vmem [thread:$0]  %s1, 128, %s23, [#allocation3]
    $region9: #{tpu_custom_call.1} parent=1 // pred_fallthru
      _
    // Predicated region
    $region10: #{tpu_custom_call.1} parent=1 // pred_check
      _
    $region11: #{tpu_custom_call.1} parent=1 // pred_check_branch
      %27 = sbr.rel (0) target = $region13
    $region12: #{tpu_custom_call.1} parent=1 // pred_region
      _
    $region13: #{tpu_custom_call.1} parent=1 // pred_fallthru
      _
    // Predicated region
    $region14: #{tpu_custom_call.1} parent=1 // pred_check
      _
    $region15: #{tpu_custom_call.1} parent=1 // pred_check_branch
      %29 = sbr.rel (0) target = $region17
    $region16: #{tpu_custom_call.1} parent=1 // pred_region
      _
    $region17: #{tpu_custom_call.1} parent=1 // pred_fallthru
      _
    // Predicated region
    $region18: #{tpu_custom_call.1} parent=1 // pred_check
      _
    $region19: #{tpu_custom_call.1} parent=1 // pred_check_branch
      %31 = sbr.rel (0) target = $region21
    $region20: #{tpu_custom_call.1} parent=1 // pred_region
      %s33 = ssub.s32 16, 16
      %34 = vsyncadd [#allocation5], %s33
      %s36 = sshll.u32 [#allocation4], 4
      %s37 = int_to_ptr.vmem [resolvable:$true] %s36
      %39 = dma.hbm_to_vmem [thread:$0]  %s4, 16, %s37, [#allocation5]
    $region21: #{tpu_custom_call.1} parent=1 // pred_fallthru
      _
    // Predicated region
    $region22: #{tpu_custom_call.1} parent=1 // pred_check
      _
    $region23: #{tpu_custom_call.1} parent=1 // pred_check_branch
      %41 = sbr.rel (0) target = $region25
    $region24: #{tpu_custom_call.1} parent=1 // pred_region
      _
    $region25: #{tpu_custom_call.1} parent=1 // pred_fallthru
      _
    // Predicated region
    $region26: #{tpu_custom_call.1} parent=1 // pred_check
      _
    $region27: #{tpu_custom_call.1} parent=1 // pred_check_branch
      %43 = sbr.rel (0) target = $region29
    $region28: #{tpu_custom_call.1} parent=1 // pred_region
      _
    $region29: #{tpu_custom_call.1} parent=1 // pred_fallthru
      _
    // Predicated region
    $region30: #{tpu_custom_call.1} parent=1 // pred_check
      _
    $region31: #{tpu_custom_call.1} parent=1 // pred_check_branch
      %45 = sbr.rel (0) target = $region33
    $region32: #{tpu_custom_call.1} parent=1 // pred_region
      %46 = dma.done [#allocation3], 128
    $region33: #{tpu_custom_call.1} parent=1 // pred_fallthru
      _
    // Predicated region
    $region34: #{tpu_custom_call.1} parent=1 // pred_check
      _
    $region35: #{tpu_custom_call.1} parent=1 // pred_check_branch
      %48 = sbr.rel (0) target = $region37
    $region36: #{tpu_custom_call.1} parent=1 // pred_region
      %49 = dma.done [#allocation5], 16
    $region37: #{tpu_custom_call.1} parent=1 // pred_fallthru
      _
    %v50 = vld [vmem:[%s0] sm:$0xff]
    %v51 = vld [vmem:[#allocation2] sm:$0xff]
    %v52 = vld [vmem:[%s2] sm:$0x1]
    %v54 = vlaneseq
    %v55 = vshrl.u32 %v54, 7
    %v56 = vsub.s32 0, %v55
    %v57 = vrot.slane %v52, %v56
    %vm59 = vcmask 64512
    %v61 = vsel %vm59, %v50, 0
    %63 = vmatprep.subr.mxu0 0.0
    %64 = vmatpush1.msra.mxu0 0.0
    %65 = vmatprep.subr.mxu0 0.0
    %66 = vmatpush1.msra.mxu0 0.0
    %67 = vmatprep.subr.mxu0 0.0
    %68 = vmatpush1.msra.mxu0 0.0
    %69 = vmatprep.subr.mxu0 0.0
    %70 = vmatpush1.msra.mxu0 0.0
    %71 = vmatprep.subr.mxu0 0.0
    %72 = vmatpush1.msra.mxu0 0.0
    %73 = vmatprep.subr.mxu0 0.0
    %74 = vmatpush1.msra.mxu0 0.0
    %75 = vmatprep.subr.mxu0 0.0
    %76 = vmatpush1.msra.mxu0 0.0
    %77 = vmatprep.subr.mxu0 0.0
    %78 = vmatpush1.msra.mxu0 0.0
    %79 = vmatprep.subr.mxu0 0.0
    %80 = vmatpush1.msra.mxu0 0.0
    %81 = vmatprep.subr.mxu0 0.0
    %82 = vmatpush1.msra.mxu0 0.0
    %83 = vmatprep.subr.mxu0 0.0
    %84 = vmatpush1.msra.mxu0 0.0
    %85 = vmatprep.subr.mxu0 0.0
    %86 = vmatpush1.msra.mxu0 0.0
    %87 = vmatprep.subr.mxu0 0.0
    %88 = vmatpush1.msra.mxu0 0.0
    %89 = vmatprep.subr.mxu0 0.0
    %90 = vmatpush1.msra.mxu0 0.0
    %91 = vmatprep.subr.mxu0 0.0
    %92 = vmatpush1.msra.mxu0 0.0
    %93 = vmatprep.subr.mxu0 0.0
    %94 = vmatpush1.msra.mxu0 %v51
    %95 = vmatprep.subr.mxu0 0.0
    %96 = vmatpush2.msra.mxu0 0.0
    %97 = vmatprep.subr.mxu0 0.0
    %98 = vmatpush2.msra.mxu0 0.0
    %99 = vmatprep.subr.mxu0 0.0
    %100 = vmatpush2.msra.mxu0 0.0
    %101 = vmatprep.subr.mxu0 0.0
    %102 = vmatpush2.msra.mxu0 0.0
    %103 = vmatprep.subr.mxu0 0.0
    %104 = vmatpush2.msra.mxu0 0.0
    %105 = vmatprep.subr.mxu0 0.0
    %106 = vmatpush2.msra.mxu0 0.0
    %107 = vmatprep.subr.mxu0 0.0
    %108 = vmatpush2.msra.mxu0 0.0
    %109 = vmatprep.subr.mxu0 0.0
    %110 = vmatpush2.msra.mxu0 0.0
    %111 = vmatprep.subr.mxu0 0.0
    %112 = vmatpush2.msra.mxu0 0.0
    %113 = vmatprep.subr.mxu0 0.0
    %114 = vmatpush2.msra.mxu0 0.0
    %115 = vmatprep.subr.mxu0 0.0
    %116 = vmatpush2.msra.mxu0 0.0
    %117 = vmatprep.subr.mxu0 0.0
    %118 = vmatpush2.msra.mxu0 0.0
    %119 = vmatprep.subr.mxu0 0.0
    %120 = vmatpush2.msra.mxu0 0.0
    %121 = vmatprep.subr.mxu0 0.0
    %122 = vmatpush2.msra.mxu0 0.0
    %123 = vmatprep.subr.mxu0 0.0
    %124 = vmatpush2.msra.mxu0 0.0
    %125 = vmatprep.subr.mxu0 0.0
    %126 = vmatpush2.msra.mxu0 0.0
    %127 = vmatprep.mubr.f32.mxu0 0.0
    %128 = vmatmul.mubr.f32.gmra.mxu0 %v61
    %v129 = vpop.f32.mrf.mxu0
    %v130 = vadd.f32 %v57, %v129
    %v131 = vpop.f32.mrf.mxu0
    %132 = vdwg.mxu0
    %v133 = vmax.f32 %v130, 0.0
    %v134 = vld [vmem:[%s3] sm:$0xff]
    %v135 = vld [vmem:[%s3 + $0x8] sm:$0xff]
    %v136 = vld [vmem:[%s3 + $0x10] sm:$0xff]
    %v137 = vld [vmem:[%s3 + $0x18] sm:$0xff]
    %v138 = vld [vmem:[#allocation4] sm:$0x1]
    %v140 = vlaneseq
    %v141 = vshrl.u32 %v140, 7
    %v142 = vsub.s32 0, %v141
    %v143 = vrot.slane %v138, %v142
    %vm145 = vcmask 261120
    %v147 = vsel %vm145, %v133, 0
    %149 = vmatprep.subr.mxu0 0.0
    %150 = vmatpush1.msra.mxu0 0.0
    %151 = vmatprep.subr.mxu0 0.0
    %152 = vmatpush1.msra.mxu0 0.0
    %153 = vmatprep.subr.mxu0 0.0
    %154 = vmatpush1.msra.mxu0 0.0
    %155 = vmatprep.subr.mxu0 0.0
    %156 = vmatpush1.msra.mxu0 0.0
    %157 = vmatprep.subr.mxu0 0.0
    %158 = vmatpush1.msra.mxu0 0.0
    %159 = vmatprep.subr.mxu0 0.0
    %160 = vmatpush1.msra.mxu0 0.0
    %161 = vmatprep.subr.mxu0 0.0
    %162 = vmatpush1.msra.mxu0 0.0
    %163 = vmatprep.subr.mxu0 0.0
    %164 = vmatpush1.msra.mxu0 0.0
    %165 = vmatprep.subr.mxu0 0.0
    %166 = vmatpush1.msra.mxu0 0.0
    %167 = vmatprep.subr.mxu0 0.0
    %168 = vmatpush1.msra.mxu0 0.0
    %169 = vmatprep.subr.mxu0 0.0
    %170 = vmatpush1.msra.mxu0 0.0
    %171 = vmatprep.subr.mxu0 0.0
    %172 = vmatpush1.msra.mxu0 0.0
    %173 = vmatprep.subr.mxu0 0.0
    %174 = vmatpush1.msra.mxu0 %v137
    %175 = vmatprep.subr.mxu0 0.0
    %176 = vmatpush1.msra.mxu0 %v136
    %177 = vmatprep.subr.mxu0 0.0
    %178 = vmatpush1.msra.mxu0 %v135
    %179 = vmatprep.subr.mxu0 0.0
    %180 = vmatpush1.msra.mxu0 %v134
    %181 = vmatprep.subr.mxu0 0.0
    %182 = vmatpush2.msra.mxu0 0.0
    %183 = vmatprep.subr.mxu0 0.0
    %184 = vmatpush2.msra.mxu0 0.0
    %185 = vmatprep.subr.mxu0 0.0
    %186 = vmatpush2.msra.mxu0 0.0
    %187 = vmatprep.subr.mxu0 0.0
    %188 = vmatpush2.msra.mxu0 0.0
    %189 = vmatprep.subr.mxu0 0.0
    %190 = vmatpush2.msra.mxu0 0.0
    %191 = vmatprep.subr.mxu0 0.0
    %192 = vmatpush2.msra.mxu0 0.0
    %193 = vmatprep.subr.mxu0 0.0
    %194 = vmatpush2.msra.mxu0 0.0
    %195 = vmatprep.subr.mxu0 0.0
    %196 = vmatpush2.msra.mxu0 0.0
    %197 = vmatprep.subr.mxu0 0.0
    %198 = vmatpush2.msra.mxu0 0.0
    %199 = vmatprep.subr.mxu0 0.0
    %200 = vmatpush2.msra.mxu0 0.0
    %201 = vmatprep.subr.mxu0 0.0
    %202 = vmatpush2.msra.mxu0 0.0
    %203 = vmatprep.subr.mxu0 0.0
    %204 = vmatpush2.msra.mxu0 0.0
    %205 = vmatprep.subr.mxu0 0.0
    %206 = vmatpush2.msra.mxu0 0.0
    %207 = vmatprep.subr.mxu0 0.0
    %208 = vmatpush2.msra.mxu0 0.0
    %209 = vmatprep.subr.mxu0 0.0
    %210 = vmatpush2.msra.mxu0 0.0
    %211 = vmatprep.subr.mxu0 0.0
    %212 = vmatpush2.msra.mxu0 0.0
    %213 = vmatprep.mubr.f32.mxu0 0.0
    %214 = vmatmul.mubr.f32.gmra.mxu0 %v147
    %v215 = vpop.f32.mrf.mxu0
    %v216 = vadd.f32 %v143, %v215
    %v217 = vpop.f32.mrf.mxu0
    %218 = vdwg.mxu0
    %v219 = vmax.f32 %v216, 0.0
    %v220 = vld [vmem:[%s5] sm:$0xff]
    %v221 = vld [vmem:[%s5 + $0x8] sm:$0xff]
    %v222 = vld [vmem:[%s5 + $0x10] sm:$0xff]
    %v223 = vld [vmem:[%s5 + $0x18] sm:$0xff]
    %v224 = vld [vmem:[%s6] sm:$0x1]
    %v226 = vlaneseq
    %v227 = vshrl.u32 %v226, 7
    %v228 = vsub.s32 0, %v227
    %v229 = vrot.slane %v224, %v228
    %v232 = vsel %vm145, %v219, 0
    %234 = vmatprep.subr.mxu0 0.0
    %235 = vmatpush1.msra.mxu0 0.0
    %236 = vmatprep.subr.mxu0 0.0
    %237 = vmatpush1.msra.mxu0 0.0
    %238 = vmatprep.subr.mxu0 0.0
    %239 = vmatpush1.msra.mxu0 0.0
    %240 = vmatprep.subr.mxu0 0.0
    %241 = vmatpush1.msra.mxu0 0.0
    %242 = vmatprep.subr.mxu0 0.0
    %243 = vmatpush1.msra.mxu0 0.0
    %244 = vmatprep.subr.mxu0 0.0
    %245 = vmatpush1.msra.mxu0 0.0
    %246 = vmatprep.subr.mxu0 0.0
    %247 = vmatpush1.msra.mxu0 0.0
    %248 = vmatprep.subr.mxu0 0.0
    %249 = vmatpush1.msra.mxu0 0.0
    %250 = vmatprep.subr.mxu0 0.0
    %251 = vmatpush1.msra.mxu0 0.0
    %252 = vmatprep.subr.mxu0 0.0
    %253 = vmatpush1.msra.mxu0 0.0
    %254 = vmatprep.subr.mxu0 0.0
    %255 = vmatpush1.msra.mxu0 0.0
    %256 = vmatprep.subr.mxu0 0.0
    %257 = vmatpush1.msra.mxu0 0.0
    %258 = vmatprep.subr.mxu0 0.0
    %259 = vmatpush1.msra.mxu0 %v223
    %260 = vmatprep.subr.mxu0 0.0
    %261 = vmatpush1.msra.mxu0 %v222
    %262 = vmatprep.subr.mxu0 0.0
    %263 = vmatpush1.msra.mxu0 %v221
    %264 = vmatprep.subr.mxu0 0.0
    %265 = vmatpush1.msra.mxu0 %v220
    %266 = vmatprep.subr.mxu0 0.0
    %267 = vmatpush2.msra.mxu0 0.0
    %268 = vmatprep.subr.mxu0 0.0
    %269 = vmatpush2.msra.mxu0 0.0
    %270 = vmatprep.subr.mxu0 0.0
    %271 = vmatpush2.msra.mxu0 0.0
    %272 = vmatprep.subr.mxu0 0.0
    %273 = vmatpush2.msra.mxu0 0.0
    %274 = vmatprep.subr.mxu0 0.0
    %275 = vmatpush2.msra.mxu0 0.0
    %276 = vmatprep.subr.mxu0 0.0
    %277 = vmatpush2.msra.mxu0 0.0
    %278 = vmatprep.subr.mxu0 0.0
    %279 = vmatpush2.msra.mxu0 0.0
    %280 = vmatprep.subr.mxu0 0.0
    %281 = vmatpush2.msra.mxu0 0.0
    %282 = vmatprep.subr.mxu0 0.0
    %283 = vmatpush2.msra.mxu0 0.0
    %284 = vmatprep.subr.mxu0 0.0
    %285 = vmatpush2.msra.mxu0 0.0
    %286 = vmatprep.subr.mxu0 0.0
    %287 = vmatpush2.msra.mxu0 0.0
    %288 = vmatprep.subr.mxu0 0.0
    %289 = vmatpush2.msra.mxu0 0.0
    %290 = vmatprep.subr.mxu0 0.0
    %291 = vmatpush2.msra.mxu0 0.0
    %292 = vmatprep.subr.mxu0 0.0
    %293 = vmatpush2.msra.mxu0 0.0
    %294 = vmatprep.subr.mxu0 0.0
    %295 = vmatpush2.msra.mxu0 0.0
    %296 = vmatprep.subr.mxu0 0.0
    %297 = vmatpush2.msra.mxu0 0.0
    %298 = vmatprep.mubr.f32.mxu0 0.0
    %299 = vmatmul.mubr.f32.gmra.mxu0 %v232
    %v300 = vpop.f32.mrf.mxu0
    %v301 = vadd.f32 %v229, %v300
    %v302 = vpop.f32.mrf.mxu0
    %303 = vdwg.mxu0
    %305 = vset.pattern.permute.xlu0 0
    %306 = vperm.xlu0 %305, %v301
    %v307 = vpop.permute.xlu0 %306
    %v309 = vadd.f32 %v307, %v301
    %310 = vrot.lane.b32.xlu0 %v301, 127
    %v311 = vpop.permute.xlu0 %310
    %vm313 = vcmask 31744
    %v314 = vsel %vm313, %v311, 0.0
    %315 = vadd.xlane.f32.xlu0 %v314
    %v316 = vpop.xlane.xlu0 %315
    %v317 = vrcp.pop 4.0
    %v318 = vmul.f32 %v316, %v317
    %v319 = vsub.f32 %v309, %v318
    %321 = vrot.lane.b32.xlu0 %v319, 127
    %v322 = vpop.permute.xlu0 %321
    %324 = vst.msk [vmem:[%s7] sm:$0xff] %vm313, %v322
    // Predicated region
    $region38: #{tpu_custom_call.1} parent=1 // pred_check
      _
    $region39: #{tpu_custom_call.1} parent=1 // pred_check_branch
      %326 = sbr.rel (0) target = $region41
    $region40: #{tpu_custom_call.1} parent=1 // pred_region
      _
    $region41: #{tpu_custom_call.1} parent=1 // pred_fallthru
      _
    // Predicated region
    $region42: #{tpu_custom_call.1} parent=1 // pred_check
      _
    $region43: #{tpu_custom_call.1} parent=1 // pred_check_branch
      %328 = sbr.rel (0) target = $region45
    $region44: #{tpu_custom_call.1} parent=1 // pred_region
      _
    $region45: #{tpu_custom_call.1} parent=1 // pred_fallthru
      _
    %329 = vsyncpa [#allocation3], 1
    %330 = vsyncpa [#allocation5], 1

</llo_original>
